<compile_context>
chip_gen: v7x
topology: tpu7x:2x2x1
jax: 0.10.0
libtpu: 0.0.40
codegen_flags: <defaults>
</compile_context>

<pallas_src>
import jax
import jax.numpy as jnp
from jax.experimental import pallas as pl
from jax.experimental.pallas import tpu as pltpu

EPS = 1e-5  # PyTorch BatchNorm1d default eps


def _round_up(n, m):
    return ((n + m - 1) // m) * m


# ---------------------------------------------------------------------------
# Kernel (single committed variant: lane-dense (1, tile_b) output row)
# ---------------------------------------------------------------------------
def classifier_kernel(p_ref, c_ref, w1p_ref, w1c_ref, b1_ref,
                      w2_ref, b2_ref, w3_ref, b3_ref, o_ref):
    # Cast activations to the matmul dtype in-kernel (free VPU filler; avoids
    # a separate wrapper-side cast pass over HBM).  No-op when dtypes match.
    p = p_ref[...].astype(w1p_ref.dtype)
    c = c_ref[...].astype(w1c_ref.dtype)

    # Layer 1: (BN1 folded) Linear(H, 128), split over parent/child halves so
    # the concat never has to be materialized in HBM.
    h = (jnp.dot(p, w1p_ref[...], preferred_element_type=jnp.float32)
         + jnp.dot(c, w1c_ref[...], preferred_element_type=jnp.float32)
         + b1_ref[...])
    h = jnp.where(h > 0, h, 0.1 * h)                       # LeakyReLU(0.1)

    # Layer 2: (BN2 folded) Linear(128, 64).
    h = jnp.dot(h.astype(w2_ref.dtype), w2_ref[...],
                preferred_element_type=jnp.float32) + b2_ref[...]
    h = jnp.where(h > 0, h, 0.2 * h)                       # LeakyReLU(0.2)

    # Layer 3: (BN3 folded) Linear(64, 1) as a VPU broadcast-multiply + lane
    # reduction (no degenerate N=1 MXU pass), stored lane-dense.
    row = jnp.sum(h * w3_ref[...], axis=-1)[None, :]       # (1, tile_b)
    o_ref[...] = (row + b3_ref[...]).astype(o_ref.dtype)


# ---------------------------------------------------------------------------
# Parameter folding (one-time, wrapper-side, f32)
# ---------------------------------------------------------------------------
def fold_params(params, matmul_dtype=jnp.bfloat16):
    """Fold each BatchNorm affine into the Linear that follows it and split W1
    into parent/child halves.  Exact rewrite of the inference-mode math; the
    only intentional drift is the cast of weights (and, in-kernel, of the
    activations) to `matmul_dtype`."""
    def bn_affine(bn):
        gamma, beta, mean, var = bn[0], bn[1], bn[2], bn[3]
        scale = gamma * jax.lax.rsqrt(var + EPS)
        return scale, beta - mean * scale

    s1, t1 = bn_affine(params["bn1"])
    s2, t2 = bn_affine(params["bn2"])
    s3, t3 = bn_affine(params["bn3"])

    w1 = params["w1"] * s1[:, None]                 # (H, 128)
    b1 = params["b1"][0] + t1 @ params["w1"]        # (128,)
    w2 = params["w2"] * s2[:, None]                 # (128, 64)
    b2 = params["b2"][0] + t2 @ params["w2"]        # (64,)
    w3 = params["w3"] * s3[:, None]                 # (64, 1)
    b3 = params["b3"][0] + t3 @ params["w3"]        # (1,)

    half = w1.shape[0] // 2
    return {
        "w1p": w1[:half].astype(matmul_dtype),
        "w1c": w1[half:].astype(matmul_dtype),
        "b1": b1[None, :].astype(jnp.float32),          # (1, 128)
        "w2": w2.astype(matmul_dtype),
        "b2": b2[None, :].astype(jnp.float32),          # (1, 64)
        "w3row": w3.T.astype(jnp.float32),              # (1, 64)
        "b3": b3[None, :].astype(jnp.float32),          # (1, 1)
    }


# ---------------------------------------------------------------------------
# VMEM budget + tile sizing
# ---------------------------------------------------------------------------
def _vmem_budget_bytes():
    """~75% of physical VMEM, capped at 100 MiB.
    v5e/v6e (128 MiB) -> 96 MiB budget; v7x (64 MiB/TC) -> 48 MiB budget."""
    phys = 64 * 1024 * 1024          # conservative default (v7x per-TC size)
    try:
        info = pltpu.get_tpu_info()
        cap = getattr(info, "vmem_capacity_bytes", None)
        if cap:
            phys = int(cap)
    except Exception:
        pass
    return min(int(phys * 3 // 4), 100 * 1024 * 1024)


def _pick_tile_b(B, half, act_itemsize, mm_itemsize, vmem_budget):
    """Largest batch tile (multiple of 128, <= 4096, <= round_up(B, 128)) whose
    double-buffered activations + resident weights fit the VMEM budget."""
    # Resident weights/biases; default pipeline allocates 2 buffers each even
    # though the constant index_map means only one DMA ever happens.
    weight_bytes = 2 * ((2 * half * 128 + 128 * 64) * mm_itemsize
                        + (128 + 64 + 64 + 1) * 4)
    # Per-batch-row VMEM: parent+child inputs (2x double-buffered), f32 output
    # row (double-buffered), and in-flight f32 intermediates (128+64 features).
    per_row = (2 * 2 * half * act_itemsize) + 2 * 4 + (128 + 64) * 4
    avail = max(vmem_budget - weight_bytes - (2 << 20), per_row * 128)
    tile_b = (avail // per_row // 128) * 128
    return max(128, min(tile_b, 4096, _round_up(B, 128)))


# ---------------------------------------------------------------------------
# Wrapper
# ---------------------------------------------------------------------------
def classifier_forward(parent, child, fparams, *, tile_b=None):
    """parent, child: (B, hidden_size // 2), any float dtype (kept as-is in
    HBM; cast to the matmul dtype in-kernel).  Returns (B, 1) float32."""
    B, half = parent.shape
    hidden = 2 * half
    mm_dtype = fparams["w1p"].dtype
    act_itemsize = jnp.dtype(parent.dtype).itemsize
    mm_itemsize = jnp.dtype(mm_dtype).itemsize

    vmem_limit = _vmem_budget_bytes()
    if tile_b is None:
        tile_b = _pick_tile_b(B, half, act_itemsize, mm_itemsize, vmem_limit)
    else:
        tile_b = min(max(128, _round_up(tile_b, 128)), _round_up(B, 128))
    num_tiles = pl.cdiv(B, tile_b)   # edge block is masked; no jnp.pad needed

    act_spec = pl.BlockSpec((tile_b, half), lambda i: (i, 0))

    def resident(shape):
        # Constant index_map: block is DMA'd once and stays VMEM-resident.
        return pl.BlockSpec(shape, lambda i: (0, 0))

    in_specs = [
        act_spec, act_spec,
        resident((half, 128)), resident((half, 128)), resident((1, 128)),
        resident((128, 64)), resident((1, 64)),
        resident((1, 64)), resident((1, 1)),
    ]
    args = (parent, child,
            fparams["w1p"], fparams["w1c"], fparams["b1"],
            fparams["w2"], fparams["b2"],
            fparams["w3row"], fparams["b3"])

    cost = pl.CostEstimate(
        flops=int(2 * B * (hidden * 128 + 128 * 64 + 64)),
        transcendentals=0,
        bytes_accessed=int(B * hidden * act_itemsize + B * 4
                           + (hidden * 128 + 128 * 64) * mm_itemsize
                           + (128 + 64 + 64 + 1) * 4),
    )
    cparams = pltpu.CompilerParams(
        dimension_semantics=("parallel",),          # megacore sharding on v7x
        vmem_limit_bytes=int(vmem_limit),
    )

    out = pl.pallas_call(
        classifier_kernel,
        out_shape=jax.ShapeDtypeStruct((1, B), jnp.float32),
        grid=(num_tiles,),
        in_specs=in_specs,
        out_specs=pl.BlockSpec((1, tile_b), lambda i: (0, i)),
        compiler_params=cparams,
        cost_estimate=cost,
    )(*args)
    return out[0, :, None]                           # (B, 1)


# ---------------------------------------------------------------------------
# Synthetic parameters + pure-JAX references
# ---------------------------------------------------------------------------
def init_params(key, hidden_size):
    """Deterministic synthetic parameters matching the nn.Module shapes."""
    ks = jax.random.split(key, 12)

    def lin(kw, kb, fan_in, fan_out):
        bound = 1.0 / jnp.sqrt(fan_in)
        w = jax.random.uniform(kw, (fan_in, fan_out), jnp.float32, -bound, bound)
        b = jax.random.uniform(kb, (1, fan_out), jnp.float32, -bound, bound)
        return w, b

    def bn(kg, kb, km, feat):
        gamma = 1.0 + 0.1 * jax.random.normal(kg, (feat,), jnp.float32)
        beta = 0.1 * jax.random.normal(kb, (feat,), jnp.float32)
        mean = 0.1 * jax.random.normal(km, (feat,), jnp.float32)
        var = jnp.ones((feat,), jnp.float32)
        return jnp.stack([gamma, beta, mean, var], axis=0)  # (4, feat)

    w1, b1 = lin(ks[0], ks[1], hidden_size, 128)
    w2, b2 = lin(ks[2], ks[3], 128, 64)
    w3, b3 = lin(ks[4], ks[5], 64, 1)
    bn1 = bn(ks[6], ks[7], ks[8], hidden_size)
    bn2 = bn(ks[9], ks[10], ks[11], 128)
    bn3 = bn(jax.random.fold_in(key, 100), jax.random.fold_in(key, 101),
             jax.random.fold_in(key, 102), 64)

    return {"bn1": bn1, "w1": w1, "b1": b1,
            "bn2": bn2, "w2": w2, "b2": b2,
            "bn3": bn3, "w3": w3, "b3": b3}


def reference_forward(parent, child, params):
    """Unfolded f32 reference = original module semantics (eval mode)."""
    x = jnp.concatenate([parent, child], axis=-1)

    def bn(v, p):
        return (v - p[2]) * jax.lax.rsqrt(p[3] + EPS) * p[0] + p[1]

    x = bn(x, params["bn1"])
    x = x @ params["w1"] + params["b1"][0]
    x = jnp.where(x > 0, x, 0.1 * x)
    x = bn(x, params["bn2"])
    x = x @ params["w2"] + params["b2"][0]
    x = jnp.where(x > 0, x, 0.2 * x)
    x = bn(x, params["bn3"])
    x = x @ params["w3"] + params["b3"][0]
    return x


def reference_from_folded(parent, child, fp):
    """Pure-JAX reference applying the exact precision policy of the kernel
    (activations cast to the matmul dtype right before each dot)."""
    p = parent.astype(fp["w1p"].dtype)
    c = child.astype(fp["w1c"].dtype)
    h = (jnp.dot(p, fp["w1p"], preferred_element_type=jnp.float32)
         + jnp.dot(c, fp["w1c"], preferred_element_type=jnp.float32)
         + fp["b1"])
    h = jnp.where(h > 0, h, 0.1 * h)
    h = jnp.dot(h.astype(fp["w2"].dtype), fp["w2"],
                preferred_element_type=jnp.float32) + fp["b2"]
    h = jnp.where(h > 0, h, 0.2 * h)
    return jnp.sum(h * fp["w3row"], axis=-1, keepdims=True) + fp["b3"]


# ---------------------------------------------------------------------------
# Demo / self-check
# ---------------------------------------------------------------------------
if __name__ == "__main__":
    key = jax.random.PRNGKey(0)
    k_parent, k_child, k_params = jax.random.split(key, 3)

    batch = 8
    hidden_size = 32            # parent/child each contribute hidden_size // 2
    half = hidden_size // 2

    parent = jax.random.normal(k_parent, (batch, half), jnp.float32)
    child = jax.random.normal(k_child, (batch, half), jnp.float32)
    params = init_params(k_params, hidden_size)

    ref_f32 = reference_forward(parent, child, params)

    # Full-f32 path: validates BN folding, concat split, un-padded edge-block
    # tiling and the lane-dense output against the unfolded module semantics.
    fp_f32 = fold_params(params, matmul_dtype=jnp.float32)
    out_f32 = jax.block_until_ready(classifier_forward(parent, child, fp_f32))
    assert out_f32.shape == (batch, 1)
    assert jnp.allclose(out_f32, ref_f32, atol=1e-3, rtol=1e-3), "f32 mismatch"

    # bf16-matmul path (recommended on v6e/v7x): weights are bf16, activations
    # stay f32 in HBM and are cast in-kernel; checked against a pure-JAX
    # reference with the identical precision policy.
    fp_bf16 = fold_params(params, matmul_dtype=jnp.bfloat16)
    out_bf16 = jax.block_until_ready(classifier_forward(parent, child, fp_bf16))
    ref_bf16 = reference_from_folded(parent, child, fp_bf16)
    assert out_bf16.shape == (batch, 1)
    assert jnp.allclose(out_bf16, ref_bf16, atol=2e-3, rtol=2e-3), "bf16 mismatch"
    assert jnp.allclose(out_bf16, ref_f32, atol=5e-2, rtol=5e-2), "bf16 drift"

    print("KERNEL_OK")
</pallas_src>

<mosaic_0001>
module attributes {stable_mosaic.version = 11 : i64} {
  func.func @classifier_kernel(%arg0: i32, %arg1: memref<128x16xf32, #tpu.memory_space<vmem>>, %arg2: memref<128x16xf32, #tpu.memory_space<vmem>>, %arg3: memref<16x128xf32, #tpu.memory_space<vmem>>, %arg4: memref<16x128xf32, #tpu.memory_space<vmem>>, %arg5: memref<1x128xf32, #tpu.memory_space<vmem>>, %arg6: memref<128x64xf32, #tpu.memory_space<vmem>>, %arg7: memref<1x64xf32, #tpu.memory_space<vmem>>, %arg8: memref<1x64xf32, #tpu.memory_space<vmem>>, %arg9: memref<1x1xf32, #tpu.memory_space<vmem>>, %arg10: memref<1x128xf32, #tpu.memory_space<vmem>>) attributes {dimension_semantics = [#tpu.dimension_semantics<parallel>], iteration_bounds = array<i64: 1>, scalar_prefetch = 0 : i64, scratch_operands = 0 : i64, tpu.core_type = #tpu.core_type<tc>, window_params = [{transform_indices = @transform_0, window_bounds = array<i64: 128, 16>}, {transform_indices = @transform_1, window_bounds = array<i64: 128, 16>}, {pipeline_mode = #tpu.pipeline_mode<synchronous>, transform_indices = @transform_2, window_bounds = array<i64: 16, 128>}, {pipeline_mode = #tpu.pipeline_mode<synchronous>, transform_indices = @transform_3, window_bounds = array<i64: 16, 128>}, {pipeline_mode = #tpu.pipeline_mode<synchronous>, transform_indices = @transform_4, window_bounds = array<i64: 1, 128>}, {pipeline_mode = #tpu.pipeline_mode<synchronous>, transform_indices = @transform_5, window_bounds = array<i64: 128, 64>}, {pipeline_mode = #tpu.pipeline_mode<synchronous>, transform_indices = @transform_6, window_bounds = array<i64: 1, 64>}, {pipeline_mode = #tpu.pipeline_mode<synchronous>, transform_indices = @transform_7, window_bounds = array<i64: 1, 64>}, {pipeline_mode = #tpu.pipeline_mode<synchronous>, transform_indices = @transform_8, window_bounds = array<i64: 1, 1>}, {transform_indices = @transform_9, window_bounds = array<i64: 1, 128>}]} {
    %c0 = arith.constant 0 : index
    %c0_0 = arith.constant 0 : index
    %0 = vector.load %arg1[%c0, %c0_0] : memref<128x16xf32, #tpu.memory_space<vmem>>, vector<128x16xf32>
    %c0_1 = arith.constant 0 : index
    %c0_2 = arith.constant 0 : index
    %1 = vector.load %arg2[%c0_1, %c0_2] : memref<128x16xf32, #tpu.memory_space<vmem>>, vector<128x16xf32>
    %c0_3 = arith.constant 0 : index
    %c0_4 = arith.constant 0 : index
    %2 = vector.load %arg3[%c0_3, %c0_4] : memref<16x128xf32, #tpu.memory_space<vmem>>, vector<16x128xf32>
    %cst = arith.constant dense<0.000000e+00> : vector<128x128xf32>
    %3 = tpu.matmul %0, %2, %cst {dimension_numbers = #tpu.dot_dimension_numbers<[1], [0], [0], [1], [0, 0, 1, 1], [], []>} : vector<128x16xf32>, vector<16x128xf32>, vector<128x128xf32> -> vector<128x128xf32>
    %c0_5 = arith.constant 0 : index
    %c0_6 = arith.constant 0 : index
    %4 = vector.load %arg4[%c0_5, %c0_6] : memref<16x128xf32, #tpu.memory_space<vmem>>, vector<16x128xf32>
    %cst_7 = arith.constant dense<0.000000e+00> : vector<128x128xf32>
    %5 = tpu.matmul %1, %4, %cst_7 {dimension_numbers = #tpu.dot_dimension_numbers<[1], [0], [0], [1], [0, 0, 1, 1], [], []>} : vector<128x16xf32>, vector<16x128xf32>, vector<128x128xf32> -> vector<128x128xf32>
    %6 = arith.addf %3, %5 : vector<128x128xf32>
    %c0_8 = arith.constant 0 : index
    %c0_9 = arith.constant 0 : index
    %7 = vector.load %arg5[%c0_8, %c0_9] : memref<1x128xf32, #tpu.memory_space<vmem>>, vector<1x128xf32>
    %8 = vector.broadcast %7 : vector<1x128xf32> to vector<128x128xf32>
    %9 = arith.addf %6, %8 : vector<128x128xf32>
    %cst_10 = arith.constant 0.000000e+00 : f32
    %10 = vector.broadcast %cst_10 : f32 to vector<128x128xf32>
    %11 = arith.cmpf ogt, %9, %10 : vector<128x128xf32>
    %cst_11 = arith.constant 1.000000e-01 : f32
    %12 = vector.broadcast %cst_11 : f32 to vector<128x128xf32>
    %13 = arith.mulf %12, %9 : vector<128x128xf32>
    %14 = arith.select %11, %9, %13 : vector<128x128xi1>, vector<128x128xf32>
    %c0_12 = arith.constant 0 : index
    %c0_13 = arith.constant 0 : index
    %15 = vector.load %arg6[%c0_12, %c0_13] : memref<128x64xf32, #tpu.memory_space<vmem>>, vector<128x64xf32>
    %cst_14 = arith.constant dense<0.000000e+00> : vector<128x64xf32>
    %16 = tpu.matmul %14, %15, %cst_14 {dimension_numbers = #tpu.dot_dimension_numbers<[1], [0], [0], [1], [0, 0, 1, 1], [], []>} : vector<128x128xf32>, vector<128x64xf32>, vector<128x64xf32> -> vector<128x64xf32>
    %c0_15 = arith.constant 0 : index
    %c0_16 = arith.constant 0 : index
    %17 = vector.load %arg7[%c0_15, %c0_16] : memref<1x64xf32, #tpu.memory_space<vmem>>, vector<1x64xf32>
    %18 = vector.broadcast %17 : vector<1x64xf32> to vector<128x64xf32>
    %19 = arith.addf %16, %18 : vector<128x64xf32>
    %cst_17 = arith.constant 0.000000e+00 : f32
    %20 = vector.broadcast %cst_17 : f32 to vector<128x64xf32>
    %21 = arith.cmpf ogt, %19, %20 : vector<128x64xf32>
    %cst_18 = arith.constant 2.000000e-01 : f32
    %22 = vector.broadcast %cst_18 : f32 to vector<128x64xf32>
    %23 = arith.mulf %22, %19 : vector<128x64xf32>
    %24 = arith.select %21, %19, %23 : vector<128x64xi1>, vector<128x64xf32>
    %c0_19 = arith.constant 0 : index
    %c0_20 = arith.constant 0 : index
    %25 = vector.load %arg8[%c0_19, %c0_20] : memref<1x64xf32, #tpu.memory_space<vmem>>, vector<1x64xf32>
    %26 = vector.broadcast %25 : vector<1x64xf32> to vector<128x64xf32>
    %27 = arith.mulf %24, %26 : vector<128x64xf32>
    %cst_21 = arith.constant dense<0.000000e+00> : vector<128xf32>
    %28 = vector.multi_reduction <add>, %27, %cst_21 [1] : vector<128x64xf32> to vector<128xf32>
    %29 = vector.shape_cast %28 : vector<128xf32> to vector<1x128xf32>
    %c0_22 = arith.constant 0 : index
    %c0_23 = arith.constant 0 : index
    %30 = vector.load %arg9[%c0_22, %c0_23] : memref<1x1xf32, #tpu.memory_space<vmem>>, vector<1x1xf32>
    %31 = vector.broadcast %30 : vector<1x1xf32> to vector<1x128xf32>
    %32 = arith.addf %29, %31 : vector<1x128xf32>
    %c0_24 = arith.constant 0 : index
    %c0_25 = arith.constant 0 : index
    %33 = vector.load %arg10[%c0_24, %c0_25] : memref<1x128xf32, #tpu.memory_space<vmem>>, vector<1x128xf32>
    tpu.vector_store %arg10[%c0_24, %c0_25], %32 {strides = array<i32>} : memref<1x128xf32, #tpu.memory_space<vmem>>, vector<1x128xf32>,
    return
  }
  func.func @transform_0(%arg0: i32) -> (i32, i32) {
    %c0_i32 = arith.constant 0 : i32
    %c0_i32_0 = arith.constant 0 : i32
    return %arg0, %c0_i32 : i32, i32
  }
  func.func @transform_1(%arg0: i32) -> (i32, i32) {
    %c0_i32 = arith.constant 0 : i32
    %c0_i32_0 = arith.constant 0 : i32
    return %arg0, %c0_i32 : i32, i32
  }
  func.func @transform_2(%arg0: i32) -> (i32, i32) {
    %c0_i32 = arith.constant 0 : i32
    %c0_i32_0 = arith.constant 0 : i32
    %c0_i32_1 = arith.constant 0 : i32
    return %c0_i32, %c0_i32_0 : i32, i32
  }
  func.func @transform_3(%arg0: i32) -> (i32, i32) {
    %c0_i32 = arith.constant 0 : i32
    %c0_i32_0 = arith.constant 0 : i32
    %c0_i32_1 = arith.constant 0 : i32
    return %c0_i32, %c0_i32_0 : i32, i32
  }
  func.func @transform_4(%arg0: i32) -> (i32, i32) {
    %c0_i32 = arith.constant 0 : i32
    %c0_i32_0 = arith.constant 0 : i32
    %c0_i32_1 = arith.constant 0 : i32
    return %c0_i32, %c0_i32_0 : i32, i32
  }
  func.func @transform_5(%arg0: i32) -> (i32, i32) {
    %c0_i32 = arith.constant 0 : i32
    %c0_i32_0 = arith.constant 0 : i32
    %c0_i32_1 = arith.constant 0 : i32
    return %c0_i32, %c0_i32_0 : i32, i32
  }
  func.func @transform_6(%arg0: i32) -> (i32, i32) {
    %c0_i32 = arith.constant 0 : i32
    %c0_i32_0 = arith.constant 0 : i32
    %c0_i32_1 = arith.constant 0 : i32
    return %c0_i32, %c0_i32_0 : i32, i32
  }
  func.func @transform_7(%arg0: i32) -> (i32, i32) {
    %c0_i32 = arith.constant 0 : i32
    %c0_i32_0 = arith.constant 0 : i32
    %c0_i32_1 = arith.constant 0 : i32
    return %c0_i32, %c0_i32_0 : i32, i32
  }
  func.func @transform_8(%arg0: i32) -> (i32, i32) {
    %c0_i32 = arith.constant 0 : i32
    %c0_i32_0 = arith.constant 0 : i32
    %c0_i32_1 = arith.constant 0 : i32
    return %c0_i32, %c0_i32_0 : i32, i32
  }
  func.func @transform_9(%arg0: i32) -> (i32, i32) {
    %c0_i32 = arith.constant 0 : i32
    %c0_i32_0 = arith.constant 0 : i32
    return %c0_i32, %arg0 : i32, i32
  }
}

</mosaic_0001>

<llo_original>
// kernel: tpu_custom_call.1
$region0: #{tpu_custom_call.1}
  #allocation0 [shape = 'u32[]', space=smem, size = 0x4, offset = 0x4, fixed_abs, tag = 'smem constant byte address 0x4 - core index']
  #allocation1 [shape = 'u32[144,128]{1,0:T(1,128)}', space=vmem, size = 0x12000, scoped, tag = 'internal scratch']
  #allocation2 [shape = 'f32[1,1]{1,0:T(1,128)S(1)}', space=vmem, size = 0x200, scoped, tag = 'scoped memory for tpu_custom_call.1']
  %s0 = inlined_call_operand.vmem [shape: f32[8,16], index: 0, kind: input, shape index: {}]
  %s1 = inlined_call_operand.vmem [shape: f32[8,16], index: 1, kind: input, shape index: {}]
  %s2 = inlined_call_operand.vmem [shape: f32[16,128], index: 2, kind: input, shape index: {}]
  %s3 = inlined_call_operand.vmem [shape: f32[16,128], index: 3, kind: input, shape index: {}]
  %s4 = inlined_call_operand.vmem [shape: f32[1,128], index: 4, kind: input, shape index: {}]
  %s5 = inlined_call_operand.vmem [shape: f32[128,64], index: 5, kind: input, shape index: {}]
  %s6 = inlined_call_operand.vmem [shape: f32[1,64], index: 6, kind: input, shape index: {}]
  %s7 = inlined_call_operand.vmem [shape: f32[1,64], index: 7, kind: input, shape index: {}]
  %s8 = inlined_call_operand.<no memory space> [shape: f32[1,1], index: 8, kind: input, shape index: {}]
  %s9 = inlined_call_operand.hbm [shape: f32[1,8], index: 9, kind: output, shape index: {}]
  %s10 = sld [smem:[#allocation0]]
  $region46: #{tpu_custom_call.1} parent=0
    _
  %s12 = ssub.s32 1, %s10
  %s13 = scalar_select 0, %s12, %s10
  %v14 = vstv %s8
  %15 = vst [vmem:[#allocation2] sm:$0x1] %v14
  $region1: #{tpu_custom_call.1} parent=0
    #allocation3 [shape = 'u8[512]{0}', space=vmem, size = 0x400, scoped, tag = 'output window, operand 0, single buffered']
    #allocation4 [shape = 's32[1]{0}', space=sflag, size = 0x4, scoped, tag = 'scoped memory for tpu_custom_call.1']
    %16 = vsyncpa [#allocation4], 0
    // Predicated region
    $region2: #{tpu_custom_call.1} parent=1 // pred_check
      _
    $region3: #{tpu_custom_call.1} parent=1 // pred_check_branch
      %18 = sbr.rel (0) target = $region5
    $region4: #{tpu_custom_call.1} parent=1 // pred_region
      _
    $region5: #{tpu_custom_call.1} parent=1 // pred_fallthru
      _
    // Predicated region
    $region6: #{tpu_custom_call.1} parent=1 // pred_check
      _
    $region7: #{tpu_custom_call.1} parent=1 // pred_check_branch
      %20 = sbr.rel (0) target = $region9
    $region8: #{tpu_custom_call.1} parent=1 // pred_region
      _
    $region9: #{tpu_custom_call.1} parent=1 // pred_fallthru
      _
    // Predicated region
    $region10: #{tpu_custom_call.1} parent=1 // pred_check
      _
    $region11: #{tpu_custom_call.1} parent=1 // pred_check_branch
      %22 = sbr.rel (0) target = $region13
    $region12: #{tpu_custom_call.1} parent=1 // pred_region
      _
    $region13: #{tpu_custom_call.1} parent=1 // pred_fallthru
      _
    // Predicated region
    $region14: #{tpu_custom_call.1} parent=1 // pred_check
      _
    $region15: #{tpu_custom_call.1} parent=1 // pred_check_branch
      %24 = sbr.rel (0) target = $region17
    $region16: #{tpu_custom_call.1} parent=1 // pred_region
      _
    $region17: #{tpu_custom_call.1} parent=1 // pred_fallthru
      _
    // Predicated region
    $region18: #{tpu_custom_call.1} parent=1 // pred_check
      _
    $region19: #{tpu_custom_call.1} parent=1 // pred_check_branch
      %26 = sbr.rel (0) target = $region21
    $region20: #{tpu_custom_call.1} parent=1 // pred_region
      _
    $region21: #{tpu_custom_call.1} parent=1 // pred_fallthru
      _
    // Predicated region
    $region22: #{tpu_custom_call.1} parent=1 // pred_check
      _
    $region23: #{tpu_custom_call.1} parent=1 // pred_check_branch
      %28 = sbr.rel (0) target = $region25
    $region24: #{tpu_custom_call.1} parent=1 // pred_region
      _
    $region25: #{tpu_custom_call.1} parent=1 // pred_fallthru
      _
    // Predicated region
    $region26: #{tpu_custom_call.1} parent=1 // pred_check
      _
    $region27: #{tpu_custom_call.1} parent=1 // pred_check_branch
      %30 = sbr.rel (0) target = $region29
    $region28: #{tpu_custom_call.1} parent=1 // pred_region
      _
    $region29: #{tpu_custom_call.1} parent=1 // pred_fallthru
      _
    // Predicated region
    $region30: #{tpu_custom_call.1} parent=1 // pred_check
      _
    $region31: #{tpu_custom_call.1} parent=1 // pred_check_branch
      %32 = sbr.rel (0) target = $region33
    $region32: #{tpu_custom_call.1} parent=1 // pred_region
      _
    $region33: #{tpu_custom_call.1} parent=1 // pred_fallthru
      _
    // Predicated region
    $region34: #{tpu_custom_call.1} parent=1 // pred_check
      _
    $region35: #{tpu_custom_call.1} parent=1 // pred_check_branch
      %34 = sbr.rel (0) target = $region37
    $region36: #{tpu_custom_call.1} parent=1 // pred_region
      _
    $region37: #{tpu_custom_call.1} parent=1 // pred_fallthru
      _
    %v35 = vld [vmem:[%s0] sm:$0xff]
    %v36 = vld [vmem:[%s0 + $0x8] sm:$0xff]
    %v37 = vld [vmem:[%s0 + $0x10] sm:$0xff]
    %v38 = vld [vmem:[%s0 + $0x18] sm:$0xff]
    %v39 = vld [vmem:[%s0 + $0x20] sm:$0xff]
    %v40 = vld [vmem:[%s0 + $0x28] sm:$0xff]
    %v41 = vld [vmem:[%s0 + $0x30] sm:$0xff]
    %v42 = vld [vmem:[%s0 + $0x38] sm:$0xff]
    %v43 = vld [vmem:[%s0 + $0x40] sm:$0xff]
    %v44 = vld [vmem:[%s0 + $0x48] sm:$0xff]
    %v45 = vld [vmem:[%s0 + $0x50] sm:$0xff]
    %v46 = vld [vmem:[%s0 + $0x58] sm:$0xff]
    %v47 = vld [vmem:[%s0 + $0x60] sm:$0xff]
    %v48 = vld [vmem:[%s0 + $0x68] sm:$0xff]
    %v49 = vld [vmem:[%s0 + $0x70] sm:$0xff]
    %v50 = vld [vmem:[%s0 + $0x78] sm:$0xff]
    %v51 = vld [vmem:[%s1] sm:$0xff]
    %v52 = vld [vmem:[%s1 + $0x8] sm:$0xff]
    %v53 = vld [vmem:[%s1 + $0x10] sm:$0xff]
    %v54 = vld [vmem:[%s1 + $0x18] sm:$0xff]
    %v55 = vld [vmem:[%s1 + $0x20] sm:$0xff]
    %v56 = vld [vmem:[%s1 + $0x28] sm:$0xff]
    %v57 = vld [vmem:[%s1 + $0x30] sm:$0xff]
    %v58 = vld [vmem:[%s1 + $0x38] sm:$0xff]
    %v59 = vld [vmem:[%s1 + $0x40] sm:$0xff]
    %v60 = vld [vmem:[%s1 + $0x48] sm:$0xff]
    %v61 = vld [vmem:[%s1 + $0x50] sm:$0xff]
    %v62 = vld [vmem:[%s1 + $0x58] sm:$0xff]
    %v63 = vld [vmem:[%s1 + $0x60] sm:$0xff]
    %v64 = vld [vmem:[%s1 + $0x68] sm:$0xff]
    %v65 = vld [vmem:[%s1 + $0x70] sm:$0xff]
    %v66 = vld [vmem:[%s1 + $0x78] sm:$0xff]
    %v67 = vld [vmem:[%s2] sm:$0xff]
    %v68 = vld [vmem:[%s2 + $0x8] sm:$0xff]
    %v69 = vld [vmem:[%s3] sm:$0xff]
    %v70 = vld [vmem:[%s3 + $0x8] sm:$0xff]
    %vm71 = vcmask 130048
    %v73 = vsel %vm71, %v51, 0
    %v76 = vsel %vm71, %v52, 0
    %v79 = vsel %vm71, %v53, 0
    %v82 = vsel %vm71, %v54, 0
    %v85 = vsel %vm71, %v55, 0
    %v88 = vsel %vm71, %v56, 0
    %v91 = vsel %vm71, %v57, 0
    %v94 = vsel %vm71, %v58, 0
    %v97 = vsel %vm71, %v59, 0
    %v100 = vsel %vm71, %v60, 0
    %v103 = vsel %vm71, %v61, 0
    %v106 = vsel %vm71, %v62, 0
    %v109 = vsel %vm71, %v63, 0
    %v112 = vsel %vm71, %v64, 0
    %v115 = vsel %vm71, %v65, 0
    %v118 = vsel %vm71, %v66, 0
    %120 = vmatprep.subr.mxu0 0.0
    %121 = vmatpush1.msra.mxu0 %v69
    %122 = vmatprep.subr.mxu0 0.0
    %123 = vmatpush1.msra.mxu0 %v70
    %124 = vmatprep.subr.mxu0 0.0
    %125 = vmatpush1.msra.mxu0 0.0
    %126 = vmatprep.subr.mxu0 0.0
    %127 = vmatpush1.msra.mxu0 0.0
    %128 = vmatprep.subr.mxu0 0.0
    %129 = vmatpush1.msra.mxu0 0.0
    %130 = vmatprep.subr.mxu0 0.0
    %131 = vmatpush1.msra.mxu0 0.0
    %132 = vmatprep.subr.mxu0 0.0
    %133 = vmatpush1.msra.mxu0 0.0
    %134 = vmatprep.subr.mxu0 0.0
    %135 = vmatpush1.msra.mxu0 0.0
    %136 = vmatprep.subr.mxu0 0.0
    %137 = vmatpush1.msra.mxu0 0.0
    %138 = vmatprep.subr.mxu0 0.0
    %139 = vmatpush1.msra.mxu0 0.0
    %140 = vmatprep.subr.mxu0 0.0
    %141 = vmatpush1.msra.mxu0 0.0
    %142 = vmatprep.subr.mxu0 0.0
    %143 = vmatpush1.msra.mxu0 0.0
    %144 = vmatprep.subr.mxu0 0.0
    %145 = vmatpush1.msra.mxu0 0.0
    %146 = vmatprep.subr.mxu0 0.0
    %147 = vmatpush1.msra.mxu0 0.0
    %148 = vmatprep.subr.mxu0 0.0
    %149 = vmatpush1.msra.mxu0 0.0
    %150 = vmatprep.subr.mxu0 0.0
    %151 = vmatpush1.msra.mxu0 0.0
    %152 = vmatprep.subr.mxu0 0.0
    %153 = vmatpush1.msra.mxu0 0.0
    %154 = vmatprep.subr.mxu0 0.0
    %155 = vmatpush1.msra.mxu0 0.0
    %156 = vmatprep.subr.mxu0 0.0
    %157 = vmatpush1.msra.mxu0 0.0
    %158 = vmatprep.subr.mxu0 0.0
    %159 = vmatpush1.msra.mxu0 0.0
    %160 = vmatprep.subr.mxu0 0.0
    %161 = vmatpush1.msra.mxu0 0.0
    %162 = vmatprep.subr.mxu0 0.0
    %163 = vmatpush1.msra.mxu0 0.0
    %164 = vmatprep.subr.mxu0 0.0
    %165 = vmatpush1.msra.mxu0 0.0
    %166 = vmatprep.subr.mxu0 0.0
    %167 = vmatpush1.msra.mxu0 0.0
    %168 = vmatprep.subr.mxu0 0.0
    %169 = vmatpush1.msra.mxu0 0.0
    %170 = vmatprep.subr.mxu0 0.0
    %171 = vmatpush1.msra.mxu0 0.0
    %172 = vmatprep.subr.mxu0 0.0
    %173 = vmatpush1.msra.mxu0 0.0
    %174 = vmatprep.subr.mxu0 0.0
    %175 = vmatpush1.msra.mxu0 0.0
    %176 = vmatprep.subr.mxu0 0.0
    %177 = vmatpush1.msra.mxu0 0.0
    %178 = vmatprep.subr.mxu0 0.0
    %179 = vmatpush1.msra.mxu0 0.0
    %180 = vmatprep.subr.mxu0 0.0
    %181 = vmatpush1.msra.mxu0 0.0
    %182 = vmatprep.subr.mxu0 0.0
    %183 = vmatpush1.msra.mxu0 0.0
    %184 = vmatprep.mubr.f32.mxu0 0.0
    %185 = vmatmul.mubr.f32.gmra.mrb[0].mxu0 %v73
    %v186 = vpop.f32.mrb[0].mxu0
    %v187 = vadd.f32 0.0, %v186
    %v188 = vpop.f32.mrb[0].mxu0
    %189 = vmatprep.mubr.f32.mxu0 0.0
    %190 = vmatmul.mubr.f32.gmra.mrb[0].mxu0 %v76
    %v191 = vpop.f32.mrb[0].mxu0
    %v192 = vadd.f32 0.0, %v191
    %v193 = vpop.f32.mrb[0].mxu0
    %194 = vmatprep.mubr.f32.mxu0 0.0
    %195 = vmatmul.mubr.f32.gmra.mrb[0].mxu0 %v79
    %v196 = vpop.f32.mrb[0].mxu0
    %v197 = vadd.f32 0.0, %v196
    %v198 = vpop.f32.mrb[0].mxu0
    %199 = vmatprep.mubr.f32.mxu0 0.0
    %200 = vmatmul.mubr.f32.gmra.mrb[0].mxu0 %v82
    %v201 = vpop.f32.mrb[0].mxu0
    %v202 = vadd.f32 0.0, %v201
    %v203 = vpop.f32.mrb[0].mxu0
    %204 = vmatprep.mubr.f32.mxu0 0.0
    %205 = vmatmul.mubr.f32.gmra.mrb[0].mxu0 %v85
    %v206 = vpop.f32.mrb[0].mxu0
    %v207 = vadd.f32 0.0, %v206
    %v208 = vpop.f32.mrb[0].mxu0
    %209 = vmatprep.mubr.f32.mxu0 0.0
    %210 = vmatmul.mubr.f32.gmra.mrb[0].mxu0 %v88
    %v211 = vpop.f32.mrb[0].mxu0
    %v212 = vadd.f32 0.0, %v211
    %v213 = vpop.f32.mrb[0].mxu0
    %214 = vmatprep.mubr.f32.mxu0 0.0
    %215 = vmatmul.mubr.f32.gmra.mrb[0].mxu0 %v91
    %v216 = vpop.f32.mrb[0].mxu0
    %v217 = vadd.f32 0.0, %v216
    %v218 = vpop.f32.mrb[0].mxu0
    %219 = vmatprep.mubr.f32.mxu0 0.0
    %220 = vmatmul.mubr.f32.gmra.mrb[0].mxu0 %v94
    %v221 = vpop.f32.mrb[0].mxu0
    %v222 = vadd.f32 0.0, %v221
    %v223 = vpop.f32.mrb[0].mxu0
    %224 = vmatprep.mubr.f32.mxu0 0.0
    %225 = vmatmul.mubr.f32.gmra.mrb[0].mxu0 %v97
    %v226 = vpop.f32.mrb[0].mxu0
    %v227 = vadd.f32 0.0, %v226
    %v228 = vpop.f32.mrb[0].mxu0
    %229 = vmatprep.mubr.f32.mxu0 0.0
    %230 = vmatmul.mubr.f32.gmra.mrb[0].mxu0 %v100
    %v231 = vpop.f32.mrb[0].mxu0
    %v232 = vadd.f32 0.0, %v231
    %v233 = vpop.f32.mrb[0].mxu0
    %234 = vmatprep.mubr.f32.mxu0 0.0
    %235 = vmatmul.mubr.f32.gmra.mrb[0].mxu0 %v103
    %v236 = vpop.f32.mrb[0].mxu0
    %v237 = vadd.f32 0.0, %v236
    %v238 = vpop.f32.mrb[0].mxu0
    %239 = vmatprep.mubr.f32.mxu0 0.0
    %240 = vmatmul.mubr.f32.gmra.mrb[0].mxu0 %v106
    %v241 = vpop.f32.mrb[0].mxu0
    %v242 = vadd.f32 0.0, %v241
    %v243 = vpop.f32.mrb[0].mxu0
    %244 = vmatprep.mubr.f32.mxu0 0.0
    %245 = vmatmul.mubr.f32.gmra.mrb[0].mxu0 %v109
    %v246 = vpop.f32.mrb[0].mxu0
    %v247 = vadd.f32 0.0, %v246
    %v248 = vpop.f32.mrb[0].mxu0
    %249 = vmatprep.mubr.f32.mxu0 0.0
    %250 = vmatmul.mubr.f32.gmra.mrb[0].mxu0 %v112
    %v251 = vpop.f32.mrb[0].mxu0
    %v252 = vadd.f32 0.0, %v251
    %v253 = vpop.f32.mrb[0].mxu0
    %254 = vmatprep.mubr.f32.mxu0 0.0
    %255 = vmatmul.mubr.f32.gmra.mrb[0].mxu0 %v115
    %v256 = vpop.f32.mrb[0].mxu0
    %v257 = vadd.f32 0.0, %v256
    %v258 = vpop.f32.mrb[0].mxu0
    %259 = vmatprep.mubr.f32.mxu0 0.0
    %260 = vmatmul.mubr.f32.gmra.mrb[0].mxu0 %v118
    %v261 = vpop.f32.mrb[0].mxu0
    %v262 = vadd.f32 0.0, %v261
    %v263 = vpop.f32.mrb[0].mxu0
    %264 = vdwg.mxu0
    %v266 = vsel %vm71, %v35, 0
    %v269 = vsel %vm71, %v36, 0
    %v272 = vsel %vm71, %v37, 0
    %v275 = vsel %vm71, %v38, 0
    %v278 = vsel %vm71, %v39, 0
    %v281 = vsel %vm71, %v40, 0
    %v284 = vsel %vm71, %v41, 0
    %v287 = vsel %vm71, %v42, 0
    %v290 = vsel %vm71, %v43, 0
    %v293 = vsel %vm71, %v44, 0
    %v296 = vsel %vm71, %v45, 0
    %v299 = vsel %vm71, %v46, 0
    %v302 = vsel %vm71, %v47, 0
    %v305 = vsel %vm71, %v48, 0
    %v308 = vsel %vm71, %v49, 0
    %v311 = vsel %vm71, %v50, 0
    %313 = vmatprep.subr.mxu0 0.0
    %314 = vmatpush1.msra.mxu0 %v67
    %315 = vmatprep.subr.mxu0 0.0
    %316 = vmatpush1.msra.mxu0 %v68
    %317 = vmatprep.subr.mxu0 0.0
    %318 = vmatpush1.msra.mxu0 0.0
    %319 = vmatprep.subr.mxu0 0.0
    %320 = vmatpush1.msra.mxu0 0.0
    %321 = vmatprep.subr.mxu0 0.0
    %322 = vmatpush1.msra.mxu0 0.0
    %323 = vmatprep.subr.mxu0 0.0
    %324 = vmatpush1.msra.mxu0 0.0
    %325 = vmatprep.subr.mxu0 0.0
    %326 = vmatpush1.msra.mxu0 0.0
    %327 = vmatprep.subr.mxu0 0.0
    %328 = vmatpush1.msra.mxu0 0.0
    %329 = vmatprep.subr.mxu0 0.0
    %330 = vmatpush1.msra.mxu0 0.0
    %331 = vmatprep.subr.mxu0 0.0
    %332 = vmatpush1.msra.mxu0 0.0
    %333 = vmatprep.subr.mxu0 0.0
    %334 = vmatpush1.msra.mxu0 0.0
    %335 = vmatprep.subr.mxu0 0.0
    %336 = vmatpush1.msra.mxu0 0.0
    %337 = vmatprep.subr.mxu0 0.0
    %338 = vmatpush1.msra.mxu0 0.0
    %339 = vmatprep.subr.mxu0 0.0
    %340 = vmatpush1.msra.mxu0 0.0
    %341 = vmatprep.subr.mxu0 0.0
    %342 = vmatpush1.msra.mxu0 0.0
    %343 = vmatprep.subr.mxu0 0.0
    %344 = vmatpush1.msra.mxu0 0.0
    %345 = vmatprep.subr.mxu0 0.0
    %346 = vmatpush1.msra.mxu0 0.0
    %347 = vmatprep.subr.mxu0 0.0
    %348 = vmatpush1.msra.mxu0 0.0
    %349 = vmatprep.subr.mxu0 0.0
    %350 = vmatpush1.msra.mxu0 0.0
    %351 = vmatprep.subr.mxu0 0.0
    %352 = vmatpush1.msra.mxu0 0.0
    %353 = vmatprep.subr.mxu0 0.0
    %354 = vmatpush1.msra.mxu0 0.0
    %355 = vmatprep.subr.mxu0 0.0
    %356 = vmatpush1.msra.mxu0 0.0
    %357 = vmatprep.subr.mxu0 0.0
    %358 = vmatpush1.msra.mxu0 0.0
    %359 = vmatprep.subr.mxu0 0.0
    %360 = vmatpush1.msra.mxu0 0.0
    %361 = vmatprep.subr.mxu0 0.0
    %362 = vmatpush1.msra.mxu0 0.0
    %363 = vmatprep.subr.mxu0 0.0
    %364 = vmatpush1.msra.mxu0 0.0
    %365 = vmatprep.subr.mxu0 0.0
    %366 = vmatpush1.msra.mxu0 0.0
    %367 = vmatprep.subr.mxu0 0.0
    %368 = vmatpush1.msra.mxu0 0.0
    %369 = vmatprep.subr.mxu0 0.0
    %370 = vmatpush1.msra.mxu0 0.0
    %371 = vmatprep.subr.mxu0 0.0
    %372 = vmatpush1.msra.mxu0 0.0
    %373 = vmatprep.subr.mxu0 0.0
    %374 = vmatpush1.msra.mxu0 0.0
    %375 = vmatprep.subr.mxu0 0.0
    %376 = vmatpush1.msra.mxu0 0.0
    %377 = vmatprep.mubr.f32.mxu0 0.0
    %378 = vmatmul.mubr.f32.gmra.mrb[0].mxu0 %v266
    %v379 = vpop.f32.mrb[0].mxu0
    %v380 = vadd.f32 %v187, %v379
    %v381 = vpop.f32.mrb[0].mxu0
    %382 = vmatprep.mubr.f32.mxu0 0.0
    %383 = vmatmul.mubr.f32.gmra.mrb[0].mxu0 %v269
    %v384 = vpop.f32.mrb[0].mxu0
    %v385 = vadd.f32 %v192, %v384
    %v386 = vpop.f32.mrb[0].mxu0
    %387 = vmatprep.mubr.f32.mxu0 0.0
    %388 = vmatmul.mubr.f32.gmra.mrb[0].mxu0 %v272
    %v389 = vpop.f32.mrb[0].mxu0
    %v390 = vadd.f32 %v197, %v389
    %v391 = vpop.f32.mrb[0].mxu0
    %392 = vmatprep.mubr.f32.mxu0 0.0
    %393 = vmatmul.mubr.f32.gmra.mrb[0].mxu0 %v275
    %v394 = vpop.f32.mrb[0].mxu0
    %v395 = vadd.f32 %v202, %v394
    %v396 = vpop.f32.mrb[0].mxu0
    %397 = vmatprep.mubr.f32.mxu0 0.0
    %398 = vmatmul.mubr.f32.gmra.mrb[0].mxu0 %v278
    %v399 = vpop.f32.mrb[0].mxu0
    %v400 = vadd.f32 %v207, %v399
    %v401 = vpop.f32.mrb[0].mxu0
    %402 = vmatprep.mubr.f32.mxu0 0.0
    %403 = vmatmul.mubr.f32.gmra.mrb[0].mxu0 %v281
    %v404 = vpop.f32.mrb[0].mxu0
    %v405 = vadd.f32 %v212, %v404
    %v406 = vpop.f32.mrb[0].mxu0
    %407 = vmatprep.mubr.f32.mxu0 0.0
    %408 = vmatmul.mubr.f32.gmra.mrb[0].mxu0 %v284
    %v409 = vpop.f32.mrb[0].mxu0
    %v410 = vadd.f32 %v217, %v409
    %v411 = vpop.f32.mrb[0].mxu0
    %412 = vmatprep.mubr.f32.mxu0 0.0
    %413 = vmatmul.mubr.f32.gmra.mrb[0].mxu0 %v287
    %v414 = vpop.f32.mrb[0].mxu0
    %v415 = vadd.f32 %v222, %v414
    %v416 = vpop.f32.mrb[0].mxu0
    %417 = vmatprep.mubr.f32.mxu0 0.0
    %418 = vmatmul.mubr.f32.gmra.mrb[0].mxu0 %v290
    %v419 = vpop.f32.mrb[0].mxu0
    %v420 = vadd.f32 %v227, %v419
    %v421 = vpop.f32.mrb[0].mxu0
    %422 = vmatprep.mubr.f32.mxu0 0.0
    %423 = vmatmul.mubr.f32.gmra.mrb[0].mxu0 %v293
    %v424 = vpop.f32.mrb[0].mxu0
    %v425 = vadd.f32 %v232, %v424
    %v426 = vpop.f32.mrb[0].mxu0
    %427 = vmatprep.mubr.f32.mxu0 0.0
    %428 = vmatmul.mubr.f32.gmra.mrb[0].mxu0 %v296
    %v429 = vpop.f32.mrb[0].mxu0
    %v430 = vadd.f32 %v237, %v429
    %v431 = vpop.f32.mrb[0].mxu0
    %432 = vmatprep.mubr.f32.mxu0 0.0
    %433 = vmatmul.mubr.f32.gmra.mrb[0].mxu0 %v299
    %v434 = vpop.f32.mrb[0].mxu0
    %v435 = vadd.f32 %v242, %v434
    %v436 = vpop.f32.mrb[0].mxu0
    %437 = vmatprep.mubr.f32.mxu0 0.0
    %438 = vmatmul.mubr.f32.gmra.mrb[0].mxu0 %v302
    %v439 = vpop.f32.mrb[0].mxu0
    %v440 = vadd.f32 %v247, %v439
    %v441 = vpop.f32.mrb[0].mxu0
    %442 = vmatprep.mubr.f32.mxu0 0.0
    %443 = vmatmul.mubr.f32.gmra.mrb[0].mxu0 %v305
    %v444 = vpop.f32.mrb[0].mxu0
    %v445 = vadd.f32 %v252, %v444
    %v446 = vpop.f32.mrb[0].mxu0
    %447 = vmatprep.mubr.f32.mxu0 0.0
    %448 = vmatmul.mubr.f32.gmra.mrb[0].mxu0 %v308
    %v449 = vpop.f32.mrb[0].mxu0
    %v450 = vadd.f32 %v257, %v449
    %v451 = vpop.f32.mrb[0].mxu0
    %452 = vmatprep.mubr.f32.mxu0 0.0
    %453 = vmatmul.mubr.f32.gmra.mrb[0].mxu0 %v311
    %v454 = vpop.f32.mrb[0].mxu0
    %v455 = vadd.f32 %v262, %v454
    %v456 = vpop.f32.mrb[0].mxu0
    %457 = vdwg.mxu0
    %v458 = vld [vmem:[%s4] sm:$0x1]
    %v460 = vlaneseq
    %v461 = vshrl.u32 %v460, 7
    %v462 = vsub.s32 0, %v461
    %v463 = vrot.slane %v458, %v462
    %v465 = vadd.f32 %v380, %v463
    %v466 = vadd.f32 %v385, %v463
    %v467 = vadd.f32 %v390, %v463
    %v468 = vadd.f32 %v395, %v463
    %v469 = vadd.f32 %v400, %v463
    %v470 = vadd.f32 %v405, %v463
    %v471 = vadd.f32 %v410, %v463
    %v472 = vadd.f32 %v415, %v463
    %v473 = vadd.f32 %v420, %v463
    %v474 = vadd.f32 %v425, %v463
    %v475 = vadd.f32 %v430, %v463
    %v476 = vadd.f32 %v435, %v463
    %v477 = vadd.f32 %v440, %v463
    %v478 = vadd.f32 %v445, %v463
    %v479 = vadd.f32 %v450, %v463
    %v480 = vadd.f32 %v455, %v463
    %vm481 = vcmp.gt.f32.partialorder %v465, 0.0
    %vm482 = vcmp.gt.f32.partialorder %v466, 0.0
    %vm483 = vcmp.gt.f32.partialorder %v467, 0.0
    %vm484 = vcmp.gt.f32.partialorder %v468, 0.0
    %vm485 = vcmp.gt.f32.partialorder %v469, 0.0
    %vm486 = vcmp.gt.f32.partialorder %v470, 0.0
    %vm487 = vcmp.gt.f32.partialorder %v471, 0.0
    %vm488 = vcmp.gt.f32.partialorder %v472, 0.0
    %vm489 = vcmp.gt.f32.partialorder %v473, 0.0
    %vm490 = vcmp.gt.f32.partialorder %v474, 0.0
    %vm491 = vcmp.gt.f32.partialorder %v475, 0.0
    %vm492 = vcmp.gt.f32.partialorder %v476, 0.0
    %vm493 = vcmp.gt.f32.partialorder %v477, 0.0
    %vm494 = vcmp.gt.f32.partialorder %v478, 0.0
    %vm495 = vcmp.gt.f32.partialorder %v479, 0.0
    %vm496 = vcmp.gt.f32.partialorder %v480, 0.0
    %v497 = vmul.f32 %v465, 0.1
    %v498 = vmul.f32 %v466, 0.1
    %v499 = vmul.f32 %v467, 0.1
    %v500 = vmul.f32 %v468, 0.1
    %v501 = vmul.f32 %v469, 0.1
    %v502 = vmul.f32 %v470, 0.1
    %v503 = vmul.f32 %v471, 0.1
    %v504 = vmul.f32 %v472, 0.1
    %v505 = vmul.f32 %v473, 0.1
    %v506 = vmul.f32 %v474, 0.1
    %v507 = vmul.f32 %v475, 0.1
    %v508 = vmul.f32 %v476, 0.1
    %v509 = vmul.f32 %v477, 0.1
    %v510 = vmul.f32 %v478, 0.1
    %v511 = vmul.f32 %v479, 0.1
    %v512 = vmul.f32 %v480, 0.1
    %v513 = vsel %vm481, %v465, %v497
    %v514 = vsel %vm482, %v466, %v498
    %v515 = vsel %vm483, %v467, %v499
    %v516 = vsel %vm484, %v468, %v500
    %v517 = vsel %vm485, %v469, %v501
    %v518 = vsel %vm486, %v470, %v502
    %v519 = vsel %vm487, %v471, %v503
    %v520 = vsel %vm488, %v472, %v504
    %v521 = vsel %vm489, %v473, %v505
    %v522 = vsel %vm490, %v474, %v506
    %v523 = vsel %vm491, %v475, %v507
    %v524 = vsel %vm492, %v476, %v508
    %v525 = vsel %vm493, %v477, %v509
    %v526 = vsel %vm494, %v478, %v510
    %v527 = vsel %vm495, %v479, %v511
    %v528 = vsel %vm496, %v480, %v512
    %v529 = vld [vmem:[%s5] sm:$0xff]
    %v530 = vld [vmem:[%s5 + $0x8] sm:$0xff]
    %v531 = vld [vmem:[%s5 + $0x10] sm:$0xff]
    %v532 = vld [vmem:[%s5 + $0x18] sm:$0xff]
    %v533 = vld [vmem:[%s5 + $0x20] sm:$0xff]
    %v534 = vld [vmem:[%s5 + $0x28] sm:$0xff]
    %v535 = vld [vmem:[%s5 + $0x30] sm:$0xff]
    %v536 = vld [vmem:[%s5 + $0x38] sm:$0xff]
    %v537 = vld [vmem:[%s5 + $0x40] sm:$0xff]
    %v538 = vld [vmem:[%s5 + $0x48] sm:$0xff]
    %v539 = vld [vmem:[%s5 + $0x50] sm:$0xff]
    %v540 = vld [vmem:[%s5 + $0x58] sm:$0xff]
    %v541 = vld [vmem:[%s5 + $0x60] sm:$0xff]
    %v542 = vld [vmem:[%s5 + $0x68] sm:$0xff]
    %v543 = vld [vmem:[%s5 + $0x70] sm:$0xff]
    %v544 = vld [vmem:[%s5 + $0x78] sm:$0xff]
    %v545 = vld [vmem:[%s6] sm:$0x1]
    %v547 = vlaneseq
    %v548 = vshrl.u32 %v547, 7
    %v549 = vsub.s32 0, %v548
    %v550 = vrot.slane %v545, %v549
    %552 = vmatprep.subr.mxu0 0.0
    %553 = vmatpush1.msra.mxu0 %v529
    %554 = vmatprep.subr.mxu0 0.0
    %555 = vmatpush1.msra.mxu0 %v530
    %556 = vmatprep.subr.mxu0 0.0
    %557 = vmatpush1.msra.mxu0 %v531
    %558 = vmatprep.subr.mxu0 0.0
    %559 = vmatpush1.msra.mxu0 %v532
    %560 = vmatprep.subr.mxu0 0.0
    %561 = vmatpush1.msra.mxu0 %v533
    %562 = vmatprep.subr.mxu0 0.0
    %563 = vmatpush1.msra.mxu0 %v534
    %564 = vmatprep.subr.mxu0 0.0
    %565 = vmatpush1.msra.mxu0 %v535
    %566 = vmatprep.subr.mxu0 0.0
    %567 = vmatpush1.msra.mxu0 %v536
    %568 = vmatprep.subr.mxu0 0.0
    %569 = vmatpush1.msra.mxu0 %v537
    %570 = vmatprep.subr.mxu0 0.0
    %571 = vmatpush1.msra.mxu0 %v538
    %572 = vmatprep.subr.mxu0 0.0
    %573 = vmatpush1.msra.mxu0 %v539
    %574 = vmatprep.subr.mxu0 0.0
    %575 = vmatpush1.msra.mxu0 %v540
    %576 = vmatprep.subr.mxu0 0.0
    %577 = vmatpush1.msra.mxu0 %v541
    %578 = vmatprep.subr.mxu0 0.0
    %579 = vmatpush1.msra.mxu0 %v542
    %580 = vmatprep.subr.mxu0 0.0
    %581 = vmatpush1.msra.mxu0 %v543
    %582 = vmatprep.subr.mxu0 0.0
    %583 = vmatpush1.msra.mxu0 %v544
    %584 = vmatprep.subr.mxu0 0.0
    %585 = vmatpush1.msra.mxu0 0.0
    %586 = vmatprep.subr.mxu0 0.0
    %587 = vmatpush1.msra.mxu0 0.0
    %588 = vmatprep.subr.mxu0 0.0
    %589 = vmatpush1.msra.mxu0 0.0
    %590 = vmatprep.subr.mxu0 0.0
    %591 = vmatpush1.msra.mxu0 0.0
    %592 = vmatprep.subr.mxu0 0.0
    %593 = vmatpush1.msra.mxu0 0.0
    %594 = vmatprep.subr.mxu0 0.0
    %595 = vmatpush1.msra.mxu0 0.0
    %596 = vmatprep.subr.mxu0 0.0
    %597 = vmatpush1.msra.mxu0 0.0
    %598 = vmatprep.subr.mxu0 0.0
    %599 = vmatpush1.msra.mxu0 0.0
    %600 = vmatprep.subr.mxu0 0.0
    %601 = vmatpush1.msra.mxu0 0.0
    %602 = vmatprep.subr.mxu0 0.0
    %603 = vmatpush1.msra.mxu0 0.0
    %604 = vmatprep.subr.mxu0 0.0
    %605 = vmatpush1.msra.mxu0 0.0
    %606 = vmatprep.subr.mxu0 0.0
    %607 = vmatpush1.msra.mxu0 0.0
    %608 = vmatprep.subr.mxu0 0.0
    %609 = vmatpush1.msra.mxu0 0.0
    %610 = vmatprep.subr.mxu0 0.0
    %611 = vmatpush1.msra.mxu0 0.0
    %612 = vmatprep.subr.mxu0 0.0
    %613 = vmatpush1.msra.mxu0 0.0
    %614 = vmatprep.subr.mxu0 0.0
    %615 = vmatpush1.msra.mxu0 0.0
    %616 = vmatprep.mubr.f32.mxu0 0.0
    %617 = vmatmul.mubr.f32.gmra.mrb[0].mxu0 %v513
    %v618 = vpop.f32.mrb[0].mxu0
    %v619 = vadd.f32 %v550, %v618
    %v620 = vpop.f32.mrb[0].mxu0
    %621 = vmatprep.mubr.f32.mxu0 0.0
    %622 = vmatmul.mubr.f32.gmra.mrb[0].mxu0 %v514
    %v623 = vpop.f32.mrb[0].mxu0
    %v624 = vadd.f32 %v550, %v623
    %v625 = vpop.f32.mrb[0].mxu0
    %626 = vmatprep.mubr.f32.mxu0 0.0
    %627 = vmatmul.mubr.f32.gmra.mrb[0].mxu0 %v515
    %v628 = vpop.f32.mrb[0].mxu0
    %v629 = vadd.f32 %v550, %v628
    %v630 = vpop.f32.mrb[0].mxu0
    %631 = vmatprep.mubr.f32.mxu0 0.0
    %632 = vmatmul.mubr.f32.gmra.mrb[0].mxu0 %v516
    %v633 = vpop.f32.mrb[0].mxu0
    %v634 = vadd.f32 %v550, %v633
    %v635 = vpop.f32.mrb[0].mxu0
    %636 = vmatprep.mubr.f32.mxu0 0.0
    %637 = vmatmul.mubr.f32.gmra.mrb[0].mxu0 %v517
    %v638 = vpop.f32.mrb[0].mxu0
    %v639 = vadd.f32 %v550, %v638
    %v640 = vpop.f32.mrb[0].mxu0
    %641 = vmatprep.mubr.f32.mxu0 0.0
    %642 = vmatmul.mubr.f32.gmra.mrb[0].mxu0 %v518
    %v643 = vpop.f32.mrb[0].mxu0
    %v644 = vadd.f32 %v550, %v643
    %v645 = vpop.f32.mrb[0].mxu0
    %646 = vmatprep.mubr.f32.mxu0 0.0
    %647 = vmatmul.mubr.f32.gmra.mrb[0].mxu0 %v519
    %v648 = vpop.f32.mrb[0].mxu0
    %v649 = vadd.f32 %v550, %v648
    %v650 = vpop.f32.mrb[0].mxu0
    %651 = vmatprep.mubr.f32.mxu0 0.0
    %652 = vmatmul.mubr.f32.gmra.mrb[0].mxu0 %v520
    %v653 = vpop.f32.mrb[0].mxu0
    %v654 = vadd.f32 %v550, %v653
    %v655 = vpop.f32.mrb[0].mxu0
    %656 = vmatprep.mubr.f32.mxu0 0.0
    %657 = vmatmul.mubr.f32.gmra.mrb[0].mxu0 %v521
    %v658 = vpop.f32.mrb[0].mxu0
    %v659 = vadd.f32 %v550, %v658
    %v660 = vpop.f32.mrb[0].mxu0
    %661 = vmatprep.mubr.f32.mxu0 0.0
    %662 = vmatmul.mubr.f32.gmra.mrb[0].mxu0 %v522
    %v663 = vpop.f32.mrb[0].mxu0
    %v664 = vadd.f32 %v550, %v663
    %v665 = vpop.f32.mrb[0].mxu0
    %666 = vmatprep.mubr.f32.mxu0 0.0
    %667 = vmatmul.mubr.f32.gmra.mrb[0].mxu0 %v523
    %v668 = vpop.f32.mrb[0].mxu0
    %v669 = vadd.f32 %v550, %v668
    %v670 = vpop.f32.mrb[0].mxu0
    %671 = vmatprep.mubr.f32.mxu0 0.0
    %672 = vmatmul.mubr.f32.gmra.mrb[0].mxu0 %v524
    %v673 = vpop.f32.mrb[0].mxu0
    %v674 = vadd.f32 %v550, %v673
    %v675 = vpop.f32.mrb[0].mxu0
    %676 = vmatprep.mubr.f32.mxu0 0.0
    %677 = vmatmul.mubr.f32.gmra.mrb[0].mxu0 %v525
    %v678 = vpop.f32.mrb[0].mxu0
    %v679 = vadd.f32 %v550, %v678
    %v680 = vpop.f32.mrb[0].mxu0
    %681 = vmatprep.mubr.f32.mxu0 0.0
    %682 = vmatmul.mubr.f32.gmra.mrb[0].mxu0 %v526
    %v683 = vpop.f32.mrb[0].mxu0
    %v684 = vadd.f32 %v550, %v683
    %v685 = vpop.f32.mrb[0].mxu0
    %686 = vmatprep.mubr.f32.mxu0 0.0
    %687 = vmatmul.mubr.f32.gmra.mrb[0].mxu0 %v527
    %v688 = vpop.f32.mrb[0].mxu0
    %v689 = vadd.f32 %v550, %v688
    %v690 = vpop.f32.mrb[0].mxu0
    %691 = vmatprep.mubr.f32.mxu0 0.0
    %692 = vmatmul.mubr.f32.gmra.mrb[0].mxu0 %v528
    %v693 = vpop.f32.mrb[0].mxu0
    %v694 = vadd.f32 %v550, %v693
    %v695 = vpop.f32.mrb[0].mxu0
    %696 = vdwg.mxu0
    %vm697 = vcmp.gt.f32.partialorder %v619, 0.0
    %vm698 = vcmp.gt.f32.partialorder %v624, 0.0
    %vm699 = vcmp.gt.f32.partialorder %v629, 0.0
    %vm700 = vcmp.gt.f32.partialorder %v634, 0.0
    %vm701 = vcmp.gt.f32.partialorder %v639, 0.0
    %vm702 = vcmp.gt.f32.partialorder %v644, 0.0
    %vm703 = vcmp.gt.f32.partialorder %v649, 0.0
    %vm704 = vcmp.gt.f32.partialorder %v654, 0.0
    %vm705 = vcmp.gt.f32.partialorder %v659, 0.0
    %vm706 = vcmp.gt.f32.partialorder %v664, 0.0
    %vm707 = vcmp.gt.f32.partialorder %v669, 0.0
    %vm708 = vcmp.gt.f32.partialorder %v674, 0.0
    %vm709 = vcmp.gt.f32.partialorder %v679, 0.0
    %vm710 = vcmp.gt.f32.partialorder %v684, 0.0
    %vm711 = vcmp.gt.f32.partialorder %v689, 0.0
    %vm712 = vcmp.gt.f32.partialorder %v694, 0.0
    %v713 = vmul.f32 %v619, 0.2
    %v714 = vmul.f32 %v624, 0.2
    %v715 = vmul.f32 %v629, 0.2
    %v716 = vmul.f32 %v634, 0.2
    %v717 = vmul.f32 %v639, 0.2
    %v718 = vmul.f32 %v644, 0.2
    %v719 = vmul.f32 %v649, 0.2
    %v720 = vmul.f32 %v654, 0.2
    %v721 = vmul.f32 %v659, 0.2
    %v722 = vmul.f32 %v664, 0.2
    %v723 = vmul.f32 %v669, 0.2
    %v724 = vmul.f32 %v674, 0.2
    %v725 = vmul.f32 %v679, 0.2
    %v726 = vmul.f32 %v684, 0.2
    %v727 = vmul.f32 %v689, 0.2
    %v728 = vmul.f32 %v694, 0.2
    %v729 = vsel %vm697, %v619, %v713
    %v730 = vsel %vm698, %v624, %v714
    %v731 = vsel %vm699, %v629, %v715
    %v732 = vsel %vm700, %v634, %v716
    %v733 = vsel %vm701, %v639, %v717
    %v734 = vsel %vm702, %v644, %v718
    %v735 = vsel %vm703, %v649, %v719
    %v736 = vsel %vm704, %v654, %v720
    %v737 = vsel %vm705, %v659, %v721
    %v738 = vsel %vm706, %v664, %v722
    %v739 = vsel %vm707, %v669, %v723
    %v740 = vsel %vm708, %v674, %v724
    %v741 = vsel %vm709, %v679, %v725
    %v742 = vsel %vm710, %v684, %v726
    %v743 = vsel %vm711, %v689, %v727
    %v744 = vsel %vm712, %v694, %v728
    %v745 = vld [vmem:[%s7] sm:$0x1]
    %v747 = vlaneseq
    %v748 = vshrl.u32 %v747, 7
    %v749 = vsub.s32 0, %v748
    %v750 = vrot.slane %v745, %v749
    %v752 = vmul.f32 %v729, %v750
    %v753 = vmul.f32 %v730, %v750
    %v754 = vmul.f32 %v731, %v750
    %v755 = vmul.f32 %v732, %v750
    %v756 = vmul.f32 %v733, %v750
    %v757 = vmul.f32 %v734, %v750
    %v758 = vmul.f32 %v735, %v750
    %v759 = vmul.f32 %v736, %v750
    %v760 = vmul.f32 %v737, %v750
    %v761 = vmul.f32 %v738, %v750
    %v762 = vmul.f32 %v739, %v750
    %v763 = vmul.f32 %v740, %v750
    %v764 = vmul.f32 %v741, %v750
    %v765 = vmul.f32 %v742, %v750
    %v766 = vmul.f32 %v743, %v750
    %v767 = vmul.f32 %v744, %v750
    %vm768 = vcmask 523264
    %v769 = vsel %vm768, %v752, 0.0
    %770 = vadd.xlane.f32.xlu0 %v769
    %v771 = vpop.xlane.xlu0 %770
    %v772 = vsel %vm768, %v753, 0.0
    %773 = vadd.xlane.f32.xlu0 %v772
    %v774 = vpop.xlane.xlu0 %773
    %v775 = vsel %vm768, %v754, 0.0
    %776 = vadd.xlane.f32.xlu0 %v775
    %v777 = vpop.xlane.xlu0 %776
    %v778 = vsel %vm768, %v755, 0.0
    %779 = vadd.xlane.f32.xlu0 %v778
    %v780 = vpop.xlane.xlu0 %779
    %v781 = vsel %vm768, %v756, 0.0
    %782 = vadd.xlane.f32.xlu0 %v781
    %v783 = vpop.xlane.xlu0 %782
    %v784 = vsel %vm768, %v757, 0.0
    %785 = vadd.xlane.f32.xlu0 %v784
    %v786 = vpop.xlane.xlu0 %785
    %v787 = vsel %vm768, %v758, 0.0
    %788 = vadd.xlane.f32.xlu0 %v787
    %v789 = vpop.xlane.xlu0 %788
    %v790 = vsel %vm768, %v759, 0.0
    %791 = vadd.xlane.f32.xlu0 %v790
    %v792 = vpop.xlane.xlu0 %791
    %v793 = vsel %vm768, %v760, 0.0
    %794 = vadd.xlane.f32.xlu0 %v793
    %v795 = vpop.xlane.xlu0 %794
    %v796 = vsel %vm768, %v761, 0.0
    %797 = vadd.xlane.f32.xlu0 %v796
    %v798 = vpop.xlane.xlu0 %797
    %v799 = vsel %vm768, %v762, 0.0
    %800 = vadd.xlane.f32.xlu0 %v799
    %v801 = vpop.xlane.xlu0 %800
    %v802 = vsel %vm768, %v763, 0.0
    %803 = vadd.xlane.f32.xlu0 %v802
    %v804 = vpop.xlane.xlu0 %803
    %v805 = vsel %vm768, %v764, 0.0
    %806 = vadd.xlane.f32.xlu0 %v805
    %v807 = vpop.xlane.xlu0 %806
    %v808 = vsel %vm768, %v765, 0.0
    %809 = vadd.xlane.f32.xlu0 %v808
    %v810 = vpop.xlane.xlu0 %809
    %v811 = vsel %vm768, %v766, 0.0
    %812 = vadd.xlane.f32.xlu0 %v811
    %v813 = vpop.xlane.xlu0 %812
    %v814 = vsel %vm768, %v767, 0.0
    %815 = vadd.xlane.f32.xlu0 %v814
    %v816 = vpop.xlane.xlu0 %815
    %v817 = vld [vmem:[#allocation2] sm:$0x1]
    %819 = vset.pattern.permute.xlu0 0
    %820 = vperm.xlu0 %819, %v817
    %v821 = vpop.permute.xlu0 %820
    %v823 = vlaneseq
    %v824 = vshrl.u32 %v823, 7
    %v825 = vsub.s32 0, %v824
    %v826 = vrot.slane %v821, %v825
    %v827 = vadd.f32 %v771, %v826
    %v828 = vadd.f32 %v774, %v826
    %v829 = vadd.f32 %v777, %v826
    %v830 = vadd.f32 %v780, %v826
    %v831 = vadd.f32 %v783, %v826
    %v832 = vadd.f32 %v786, %v826
    %v833 = vadd.f32 %v789, %v826
    %v834 = vadd.f32 %v792, %v826
    %v835 = vadd.f32 %v795, %v826
    %v836 = vadd.f32 %v798, %v826
    %v837 = vadd.f32 %v801, %v826
    %v838 = vadd.f32 %v804, %v826
    %v839 = vadd.f32 %v807, %v826
    %v840 = vadd.f32 %v810, %v826
    %v841 = vadd.f32 %v813, %v826
    %v842 = vadd.f32 %v816, %v826
    %v859 = vlaneseq
    %v860 = vand.u32 %v859, 127
    %v861 = vlaneseq
    %v862 = vshrl.u32 %v861, 7
    %v863 = vsub.s32 %v860, %v862
    %v864 = vrot.slane %v827, %v863
    %v865 = vadd.s32 %v860, 4294967288
    %v866 = vlaneseq
    %v867 = vshrl.u32 %v866, 7
    %v868 = vsub.s32 %v865, %v867
    %v869 = vrot.slane %v828, %v868
    %vm870 = vcmask 130112
    %v871 = vsel %vm870, %v869, %v864
    %v872 = vadd.s32 %v860, 4294967280
    %v873 = vlaneseq
    %v874 = vshrl.u32 %v873, 7
    %v875 = vsub.s32 %v872, %v874
    %v876 = vrot.slane %v829, %v875
    %vm877 = vcmask 195712
    %v878 = vsel %vm877, %v876, %v871
    %v879 = vadd.s32 %v860, 4294967272
    %v880 = vlaneseq
    %v881 = vshrl.u32 %v880, 7
    %v882 = vsub.s32 %v879, %v881
    %v883 = vrot.slane %v830, %v882
    %vm884 = vcmask 261312
    %v885 = vsel %vm884, %v883, %v878
    %v886 = vadd.s32 %v860, 4294967264
    %v887 = vlaneseq
    %v888 = vshrl.u32 %v887, 7
    %v889 = vsub.s32 %v886, %v888
    %v890 = vrot.slane %v831, %v889
    %vm891 = vcmask 326912
    %v892 = vsel %vm891, %v890, %v885
    %v893 = vadd.s32 %v860, 4294967256
    %v894 = vlaneseq
    %v895 = vshrl.u32 %v894, 7
    %v896 = vsub.s32 %v893, %v895
    %v897 = vrot.slane %v832, %v896
    %vm898 = vcmask 392512
    %v899 = vsel %vm898, %v897, %v892
    %v900 = vadd.s32 %v860, 4294967248
    %v901 = vlaneseq
    %v902 = vshrl.u32 %v901, 7
    %v903 = vsub.s32 %v900, %v902
    %v904 = vrot.slane %v833, %v903
    %vm905 = vcmask 458112
    %v906 = vsel %vm905, %v904, %v899
    %v907 = vadd.s32 %v860, 4294967240
    %v908 = vlaneseq
    %v909 = vshrl.u32 %v908, 7
    %v910 = vsub.s32 %v907, %v909
    %v911 = vrot.slane %v834, %v910
    %vm912 = vcmask 523712
    %v913 = vsel %vm912, %v911, %v906
    %v914 = vadd.s32 %v860, 4294967232
    %v915 = vlaneseq
    %v916 = vshrl.u32 %v915, 7
    %v917 = vsub.s32 %v914, %v916
    %v918 = vrot.slane %v835, %v917
    %vm919 = vcmask 589312
    %v920 = vsel %vm919, %v918, %v913
    %v921 = vadd.s32 %v860, 4294967224
    %v922 = vlaneseq
    %v923 = vshrl.u32 %v922, 7
    %v924 = vsub.s32 %v921, %v923
    %v925 = vrot.slane %v836, %v924
    %vm926 = vcmask 654912
    %v927 = vsel %vm926, %v925, %v920
    %v928 = vadd.s32 %v860, 4294967216
    %v929 = vlaneseq
    %v930 = vshrl.u32 %v929, 7
    %v931 = vsub.s32 %v928, %v930
    %v932 = vrot.slane %v837, %v931
    %vm933 = vcmask 720512
    %v934 = vsel %vm933, %v932, %v927
    %v935 = vadd.s32 %v860, 4294967208
    %v936 = vlaneseq
    %v937 = vshrl.u32 %v936, 7
    %v938 = vsub.s32 %v935, %v937
    %v939 = vrot.slane %v838, %v938
    %vm940 = vcmask 786112
    %v941 = vsel %vm940, %v939, %v934
    %v942 = vadd.s32 %v860, 4294967200
    %v943 = vlaneseq
    %v944 = vshrl.u32 %v943, 7
    %v945 = vsub.s32 %v942, %v944
    %v946 = vrot.slane %v839, %v945
    %vm947 = vcmask 851712
    %v948 = vsel %vm947, %v946, %v941
    %v949 = vadd.s32 %v860, 4294967192
    %v950 = vlaneseq
    %v951 = vshrl.u32 %v950, 7
    %v952 = vsub.s32 %v949, %v951
    %v953 = vrot.slane %v840, %v952
    %vm954 = vcmask 917312
    %v955 = vsel %vm954, %v953, %v948
    %v956 = vadd.s32 %v860, 4294967184
    %v957 = vlaneseq
    %v958 = vshrl.u32 %v957, 7
    %v959 = vsub.s32 %v956, %v958
    %v960 = vrot.slane %v841, %v959
    %vm961 = vcmask 982912
    %v962 = vsel %vm961, %v960, %v955
    %v963 = vadd.s32 %v860, 4294967176
    %v964 = vlaneseq
    %v965 = vshrl.u32 %v964, 7
    %v966 = vsub.s32 %v963, %v965
    %v967 = vrot.slane %v842, %v966
    %vm968 = vcmask 1048512
    %v969 = vsel %vm968, %v967, %v962
    %971 = vst [vmem:[#allocation3] sm:$0x1] %v969
    // Predicated region
    $region38: #{tpu_custom_call.1} parent=1 // pred_check
      _
    $region39: #{tpu_custom_call.1} parent=1 // pred_check_branch
      %973 = sbr.rel (0) target = $region41
    $region40: #{tpu_custom_call.1} parent=1 // pred_region
      %s975 = ssub.s32 16, 16
      %976 = vsyncadd [#allocation4], %s975
      %s978 = sshll.u32 [#allocation3], 4
      %s979 = int_to_ptr.vmem [resolvable:$true] %s978
      %981 = dma.vmem_to_hbm [thread:$0]  %s979, 16, %s9, [#allocation4]
    $region41: #{tpu_custom_call.1} parent=1 // pred_fallthru
      _
    // Predicated region
    $region42: #{tpu_custom_call.1} parent=1 // pred_check
      _
    $region43: #{tpu_custom_call.1} parent=1 // pred_check_branch
      %983 = sbr.rel (0) target = $region45
    $region44: #{tpu_custom_call.1} parent=1 // pred_region
      %984 = dma.done [#allocation4], 16
    $region45: #{tpu_custom_call.1} parent=1 // pred_fallthru
      _
    %985 = vsyncpa [#allocation4], 1

</llo_original>
